<compile_context>
chip_gen: v6e
topology: v6e:2x2x1
jax: 0.10.0
libtpu: 0.0.40
codegen_flags: <defaults>
</compile_context>

<pallas_src>
import jax
import jax.numpy as jnp
from jax.experimental import pallas as pl
from jax.experimental.pallas import tpu as pltpu

H1, H2 = 256, 128  # hidden widths of the discriminator


# --------------------------------------------------------------------------
# Kernel
# --------------------------------------------------------------------------
def discriminator_kernel(x_ref, w1_ref, b1_ref, w2_ref, b2_ref, w3_ref, b3_ref,
                         o_ref):
    ep = b1_ref.dtype  # epilogue dtype: bf16 (v6e/v7x) or f32 (v5e and older)

    # ----- Layer 1: (tm, D) @ (D, 256) on the MXU, bf16 in / f32 accumulate.
    xb = x_ref[...].astype(jnp.bfloat16)            # no-op if x is already bf16
    h1 = jnp.dot(xb, w1_ref[...], preferred_element_type=jnp.float32)
    h1 = h1.astype(ep) + b1_ref[...]                # bias in epilogue dtype
    h1 = jnp.maximum(h1, 0.2 * h1)                  # LeakyReLU(0.2): mul+max

    # ----- Layer 2: (tm, 256) @ (256, 128) on the MXU.
    # astype is a no-op when the epilogue already runs in bf16.
    h2 = jnp.dot(h1.astype(jnp.bfloat16), w2_ref[...],
                 preferred_element_type=jnp.float32)
    h2 = h2.astype(ep) + b2_ref[...]
    h2 = jnp.maximum(h2, 0.2 * h2)                  # LeakyReLU(0.2)

    # ----- Layer 3: single output column -> keep it off the MXU.
    # VPU multiply by the (1, 128) weight row + XLU cross-lane sum in f32.
    h3 = jnp.sum(h2.astype(jnp.float32) * w3_ref[...],
                 axis=-1, keepdims=True) + b3_ref[...]
    o_ref[...] = jax.nn.sigmoid(h3)                 # Sigmoid (EUP)


# --------------------------------------------------------------------------
# Hardware-aware configuration helpers
# --------------------------------------------------------------------------
def _device_kind():
    try:
        return jax.devices()[0].device_kind.lower()
    except Exception:
        return ""


def _vmem_capacity_bytes():
    """Physical VMEM per TensorCore; conservative 64 MiB when unknown."""
    try:
        return int(pltpu.get_tpu_info().vmem_capacity_bytes)
    except Exception:
        kind = _device_kind()
        if ("v5" in kind) or ("v6" in kind):
            return 128 * 1024 * 1024
        return 64 * 1024 * 1024          # v7x / unknown: stay conservative


def _epilogue_dtype():
    """bf16 epilogue on chips with a bf16 VALU (v6e/v7x); f32 otherwise."""
    kind = _device_kind()
    if any(g in kind for g in ("v2", "v3", "v4", "v5")):
        return jnp.float32
    return jnp.bfloat16


def _pick_tm(batch, input_dim, vmem_bytes):
    """MXU-aligned batch tile sized against the chip's VMEM.

    - batch <= 128: one block (grid = 1, zero grid overhead).
    - 128 < batch <= 256: tm = 128 so grid >= 2 (both v7x TCs get work).
    - Otherwise: largest candidate that fits ~55% of physical VMEM after
      subtracting the (double-buffered) resident-weight footprint, capped at
      half the batch so the grid has >= 2 steps; small odd tile counts are
      rebalanced to an even count for v7x's 2 TCs.
    """
    if batch <= 128:
        return batch
    if batch <= 256:
        return 128

    budget = int(vmem_bytes * 0.55)
    # Grid-invariant weights still get two VMEM buffers by default.
    weight_fixed = 2 * (2 * input_dim * H1 + 2 * H1 * H2          # bf16 w1, w2
                        + 4 * (H1 + H2 + H2 + 1))                 # f32 biases, w3
    budget = max(budget - weight_fixed, 4 * 1024 * 1024)
    per_row = (2 * 4 * input_dim          # double-buffered x tile (f32 worst case)
               + 4 * (H1 + H2)            # f32 h1 / h2 temporaries
               + 2 * 4 * 128)             # double-buffered lane-padded out tile
    cap = max(128, budget // per_row)

    if vmem_bytes >= 96 * 1024 * 1024:    # v5e / v6e (128 MiB VMEM)
        candidates = (8192, 4096, 2048, 1024, 512, 256, 128)
    else:                                 # v7x (64 MiB/TC) or unknown
        candidates = (4096, 2048, 1024, 512, 256, 128)

    half = pl.cdiv(batch, 2)
    tm = 128
    for cand in candidates:
        if cand <= cap and cand <= half:
            tm = cand
            break

    # Rebalance a small odd tile count (e.g. 3 = 2+1 split) onto 2 TCs.
    n = pl.cdiv(batch, tm)
    if n <= 4 and (n % 2 == 1) and tm > 128:
        smaller = tm // 2
        if pl.cdiv(batch, smaller) % 2 == 0:
            tm = smaller
    return tm


# --------------------------------------------------------------------------
# Wrapper
# --------------------------------------------------------------------------
def discriminator_forward(x, params, *, tm=None):
    """x: (B, input_dim) float32 or bfloat16. Returns (B, 1) float32 probs."""
    w1, b1, w2, b2, w3, b3 = params
    B, D = x.shape

    vmem_bytes = _vmem_capacity_bytes()
    ep = _epilogue_dtype()
    if tm is None:
        tm = _pick_tm(B, D, vmem_bytes)

    # Pad the batch to a multiple of the tile; padded rows are discarded.
    n_tiles = pl.cdiv(B, tm)
    Bp = n_tiles * tm
    if Bp != B:
        x = jnp.pad(x, ((0, Bp - B), (0, 0)))

    # Cast the small grid-invariant params once in the wrapper (amortized
    # across the whole grid): matmul weights to bf16 (MXU rate, half HBM),
    # layer-1/2 biases to the epilogue dtype, layer-3 params stay f32.
    w1b = w1.astype(jnp.bfloat16)
    w2b = w2.astype(jnp.bfloat16)
    b1e = b1.astype(ep)
    b2e = b2.astype(ep)
    w3f = w3.astype(jnp.float32)
    b3f = b3.astype(jnp.float32)

    # Scoped-VMEM limit: 2x the estimated need, clamped to
    # [16 MiB, 75% of physical VMEM] (raises small scoped defaults for big
    # tiles on v5e/v6e while staying inside v7x's 64 MiB per TC).
    x_item = x.dtype.itemsize
    tile_bytes = tm * (2 * x_item * D + 4 * (H1 + H2) + 2 * 4 * 128)
    weight_bytes = 2 * (2 * w1b.size + 2 * w2b.size
                        + b1e.size * b1e.dtype.itemsize
                        + b2e.size * b2e.dtype.itemsize
                        + 4 * (w3f.size + b3f.size))
    vmem_limit = int(min(int(0.75 * vmem_bytes),
                         max(16 * 1024 * 1024,
                             2 * (tile_bytes + weight_bytes))))

    const = lambda shape: pl.BlockSpec(shape, lambda i: (0,) * len(shape))

    out = pl.pallas_call(
        discriminator_kernel,
        out_shape=jax.ShapeDtypeStruct((Bp, 1), jnp.float32),
        grid_spec=pltpu.PrefetchScalarGridSpec(
            num_scalar_prefetch=0,
            grid=(n_tiles,),
            in_specs=[
                pl.BlockSpec((tm, D), lambda i: (i, 0)),   # batch-tiled x
                const(w1b.shape), const(b1e.shape),         # resident params
                const(w2b.shape), const(b2e.shape),
                const(w3f.shape), const(b3f.shape),
            ],
            out_specs=pl.BlockSpec((tm, 1), lambda i: (i, 0)),
        ),
        compiler_params=pltpu.CompilerParams(
            dimension_semantics=("parallel",),
            vmem_limit_bytes=vmem_limit),
    )(x, w1b, b1e, w2b, b2e, w3f, b3f)

    return out[:B]


# --------------------------------------------------------------------------
# Params + references
# --------------------------------------------------------------------------
def init_params(key, input_dim):
    """Deterministic synthetic init (PyTorch-like uniform fan-in bounds)."""
    ks = jax.random.split(key, 6)

    def unif(k, shape, fan_in):
        bound = 1.0 / jnp.sqrt(fan_in)
        return jax.random.uniform(k, shape, jnp.float32, -bound, bound)

    w1 = unif(ks[0], (input_dim, H1), input_dim)
    b1 = unif(ks[1], (1, H1), input_dim)
    w2 = unif(ks[2], (H1, H2), H1)
    b2 = unif(ks[3], (1, H2), H1)
    w3 = unif(ks[4], (1, H2), H2)       # PyTorch (out=1, in=128) row layout
    b3 = unif(ks[5], (1, 1), H2)
    return (w1, b1, w2, b2, w3, b3)


def reference_forward(x, params, epilogue_dtype):
    """Pure-JAX reference mirroring the kernel's exact numeric path."""
    w1, b1, w2, b2, w3, b3 = params
    bf = lambda a: a.astype(jnp.bfloat16)
    ep = lambda a: a.astype(epilogue_dtype)
    h = jnp.dot(bf(x), bf(w1), preferred_element_type=jnp.float32)
    h = ep(h) + ep(b1)
    h = jnp.maximum(h, 0.2 * h)
    h = jnp.dot(bf(h), bf(w2), preferred_element_type=jnp.float32)
    h = ep(h) + ep(b2)
    h = jnp.maximum(h, 0.2 * h)
    h = jnp.sum(h.astype(jnp.float32) * w3, axis=-1, keepdims=True) + b3
    return jax.nn.sigmoid(h)


def reference_forward_f32(x, params):
    """Full-precision reference matching the original PyTorch module."""
    w1, b1, w2, b2, w3, b3 = params
    h = x @ w1 + b1
    h = jnp.where(h > 0, h, 0.2 * h)
    h = h @ w2 + b2
    h = jnp.where(h > 0, h, 0.2 * h)
    h = h @ w3.T + b3
    return jax.nn.sigmoid(h)


# --------------------------------------------------------------------------
# Smoke test
# --------------------------------------------------------------------------
if __name__ == "__main__":
    key = jax.random.PRNGKey(0)
    k_params, k_x = jax.random.split(key)

    batch, input_dim = 16, 64
    params = init_params(k_params, input_dim)
    x = jax.random.normal(k_x, (batch, input_dim), jnp.float32)

    out = jax.block_until_ready(discriminator_forward(x, params))
    assert out.shape == (batch, 1)

    # Tight check against a reference that mirrors the kernel's numeric path.
    ref = reference_forward(x, params, _epilogue_dtype())
    assert jnp.allclose(out, ref, atol=2e-3, rtol=2e-3), (
        float(jnp.max(jnp.abs(out - ref))))

    # Loose check against the true f32 PyTorch-equivalent model (bf16 MXU
    # deviation only).
    ref32 = reference_forward_f32(x, params)
    assert jnp.allclose(out, ref32, atol=3e-2), (
        float(jnp.max(jnp.abs(out - ref32))))

    print("KERNEL_OK")
</pallas_src>

<mosaic_0001>
module attributes {stable_mosaic.version = 11 : i64} {
  func.func @discriminator_kernel(%arg0: i32, %arg1: memref<16x64xf32, #tpu.memory_space<vmem>>, %arg2: memref<64x256xbf16, #tpu.memory_space<vmem>>, %arg3: memref<1x256xbf16, #tpu.memory_space<vmem>>, %arg4: memref<256x128xbf16, #tpu.memory_space<vmem>>, %arg5: memref<1x128xbf16, #tpu.memory_space<vmem>>, %arg6: memref<1x128xf32, #tpu.memory_space<vmem>>, %arg7: memref<1x1xf32, #tpu.memory_space<vmem>>, %arg8: memref<16x1xf32, #tpu.memory_space<vmem>>) attributes {dimension_semantics = [#tpu.dimension_semantics<parallel>], iteration_bounds = array<i64: 1>, scalar_prefetch = 0 : i64, scratch_operands = 0 : i64, tpu.core_type = #tpu.core_type<tc>, window_params = [{transform_indices = @transform_0, window_bounds = array<i64: 16, 64>}, {pipeline_mode = #tpu.pipeline_mode<synchronous>, transform_indices = @transform_1, window_bounds = array<i64: 64, 256>}, {pipeline_mode = #tpu.pipeline_mode<synchronous>, transform_indices = @transform_2, window_bounds = array<i64: 1, 256>}, {pipeline_mode = #tpu.pipeline_mode<synchronous>, transform_indices = @transform_3, window_bounds = array<i64: 256, 128>}, {pipeline_mode = #tpu.pipeline_mode<synchronous>, transform_indices = @transform_4, window_bounds = array<i64: 1, 128>}, {pipeline_mode = #tpu.pipeline_mode<synchronous>, transform_indices = @transform_5, window_bounds = array<i64: 1, 128>}, {pipeline_mode = #tpu.pipeline_mode<synchronous>, transform_indices = @transform_6, window_bounds = array<i64: 1, 1>}, {transform_indices = @transform_7, window_bounds = array<i64: 16, 1>}]} {
    %c0 = arith.constant 0 : index
    %c0_0 = arith.constant 0 : index
    %0 = vector.load %arg1[%c0, %c0_0] : memref<16x64xf32, #tpu.memory_space<vmem>>, vector<16x64xf32>
    %1 = arith.truncf %0 : vector<16x64xf32> to vector<16x64xbf16>
    %c0_1 = arith.constant 0 : index
    %c0_2 = arith.constant 0 : index
    %2 = vector.load %arg2[%c0_1, %c0_2] : memref<64x256xbf16, #tpu.memory_space<vmem>>, vector<64x256xbf16>
    %cst = arith.constant dense<0.000000e+00> : vector<16x256xf32>
    %3 = tpu.matmul %1, %2, %cst {dimension_numbers = #tpu.dot_dimension_numbers<[1], [0], [0], [1], [0, 0, 1, 1], [], []>} : vector<16x64xbf16>, vector<64x256xbf16>, vector<16x256xf32> -> vector<16x256xf32>
    %4 = arith.truncf %3 : vector<16x256xf32> to vector<16x256xbf16>
    %c0_3 = arith.constant 0 : index
    %c0_4 = arith.constant 0 : index
    %5 = vector.load %arg3[%c0_3, %c0_4] : memref<1x256xbf16, #tpu.memory_space<vmem>>, vector<1x256xbf16>
    %6 = vector.broadcast %5 : vector<1x256xbf16> to vector<16x256xbf16>
    %7 = arith.addf %4, %6 : vector<16x256xbf16>
    %cst_5 = arith.constant 2.001950e-01 : bf16
    %8 = vector.broadcast %cst_5 : bf16 to vector<16x256xbf16>
    %9 = arith.mulf %8, %7 : vector<16x256xbf16>
    %10 = arith.maximumf %7, %9 : vector<16x256xbf16>
    %c0_6 = arith.constant 0 : index
    %c0_7 = arith.constant 0 : index
    %11 = vector.load %arg4[%c0_6, %c0_7] : memref<256x128xbf16, #tpu.memory_space<vmem>>, vector<256x128xbf16>
    %cst_8 = arith.constant dense<0.000000e+00> : vector<16x128xf32>
    %12 = tpu.matmul %10, %11, %cst_8 {dimension_numbers = #tpu.dot_dimension_numbers<[1], [0], [0], [1], [0, 0, 1, 1], [], []>} : vector<16x256xbf16>, vector<256x128xbf16>, vector<16x128xf32> -> vector<16x128xf32>
    %13 = arith.truncf %12 : vector<16x128xf32> to vector<16x128xbf16>
    %c0_9 = arith.constant 0 : index
    %c0_10 = arith.constant 0 : index
    %14 = vector.load %arg5[%c0_9, %c0_10] : memref<1x128xbf16, #tpu.memory_space<vmem>>, vector<1x128xbf16>
    %15 = vector.broadcast %14 : vector<1x128xbf16> to vector<16x128xbf16>
    %16 = arith.addf %13, %15 : vector<16x128xbf16>
    %cst_11 = arith.constant 2.001950e-01 : bf16
    %17 = vector.broadcast %cst_11 : bf16 to vector<16x128xbf16>
    %18 = arith.mulf %17, %16 : vector<16x128xbf16>
    %19 = arith.maximumf %16, %18 : vector<16x128xbf16>
    %20 = arith.extf %19 : vector<16x128xbf16> to vector<16x128xf32>
    %c0_12 = arith.constant 0 : index
    %c0_13 = arith.constant 0 : index
    %21 = vector.load %arg6[%c0_12, %c0_13] : memref<1x128xf32, #tpu.memory_space<vmem>>, vector<1x128xf32>
    %22 = vector.broadcast %21 : vector<1x128xf32> to vector<16x128xf32>
    %23 = arith.mulf %20, %22 : vector<16x128xf32>
    %cst_14 = arith.constant dense<0.000000e+00> : vector<16xf32>
    %24 = vector.multi_reduction <add>, %23, %cst_14 [1] : vector<16x128xf32> to vector<16xf32>
    %25 = vector.shape_cast %24 : vector<16xf32> to vector<16x1xf32>
    %c0_15 = arith.constant 0 : index
    %c0_16 = arith.constant 0 : index
    %26 = vector.load %arg7[%c0_15, %c0_16] : memref<1x1xf32, #tpu.memory_space<vmem>>, vector<1x1xf32>
    %27 = vector.broadcast %26 : vector<1x1xf32> to vector<16x1xf32>
    %28 = arith.addf %25, %27 : vector<16x1xf32>
    %29 = arith.negf %28 : vector<16x1xf32>
    %30 = math.exp %29 : vector<16x1xf32>
    %cst_17 = arith.constant 1.000000e+00 : f32
    %31 = vector.broadcast %cst_17 : f32 to vector<16x1xf32>
    %32 = arith.addf %31, %30 : vector<16x1xf32>
    %33 = arith.divf %31, %32 : vector<16x1xf32>
    %c0_18 = arith.constant 0 : index
    %c0_19 = arith.constant 0 : index
    %34 = vector.load %arg8[%c0_18, %c0_19] : memref<16x1xf32, #tpu.memory_space<vmem>>, vector<16x1xf32>
    tpu.vector_store %arg8[%c0_18, %c0_19], %33 {strides = array<i32>} : memref<16x1xf32, #tpu.memory_space<vmem>>, vector<16x1xf32>,
    return
  }
  func.func @transform_0(%arg0: i32) -> (i32, i32) {
    %c0_i32 = arith.constant 0 : i32
    %c0_i32_0 = arith.constant 0 : i32
    return %arg0, %c0_i32 : i32, i32
  }
  func.func @transform_1(%arg0: i32) -> (i32, i32) {
    %c0_i32 = arith.constant 0 : i32
    %c0_i32_0 = arith.constant 0 : i32
    %c0_i32_1 = arith.constant 0 : i32
    return %c0_i32, %c0_i32_0 : i32, i32
  }
  func.func @transform_2(%arg0: i32) -> (i32, i32) {
    %c0_i32 = arith.constant 0 : i32
    %c0_i32_0 = arith.constant 0 : i32
    %c0_i32_1 = arith.constant 0 : i32
    return %c0_i32, %c0_i32_0 : i32, i32
  }
  func.func @transform_3(%arg0: i32) -> (i32, i32) {
    %c0_i32 = arith.constant 0 : i32
    %c0_i32_0 = arith.constant 0 : i32
    %c0_i32_1 = arith.constant 0 : i32
    return %c0_i32, %c0_i32_0 : i32, i32
  }
  func.func @transform_4(%arg0: i32) -> (i32, i32) {
    %c0_i32 = arith.constant 0 : i32
    %c0_i32_0 = arith.constant 0 : i32
    %c0_i32_1 = arith.constant 0 : i32
    return %c0_i32, %c0_i32_0 : i32, i32
  }
  func.func @transform_5(%arg0: i32) -> (i32, i32) {
    %c0_i32 = arith.constant 0 : i32
    %c0_i32_0 = arith.constant 0 : i32
    %c0_i32_1 = arith.constant 0 : i32
    return %c0_i32, %c0_i32_0 : i32, i32
  }
  func.func @transform_6(%arg0: i32) -> (i32, i32) {
    %c0_i32 = arith.constant 0 : i32
    %c0_i32_0 = arith.constant 0 : i32
    %c0_i32_1 = arith.constant 0 : i32
    return %c0_i32, %c0_i32_0 : i32, i32
  }
  func.func @transform_7(%arg0: i32) -> (i32, i32) {
    %c0_i32 = arith.constant 0 : i32
    %c0_i32_0 = arith.constant 0 : i32
    return %arg0, %c0_i32 : i32, i32
  }
}

</mosaic_0001>

<llo_original>
// kernel: tpu_custom_call.1
$region0: #{tpu_custom_call.1}
  #allocation0 [shape = 'u32[]', space=smem, size = 0x4, offset = 0x4, fixed_abs, tag = 'smem constant byte address 0x4 - core index']
  #allocation1 [shape = 'u32[144,128]{1,0:T(1,128)}', space=vmem, size = 0x12000, scoped, tag = 'internal scratch']
  #allocation2 [shape = 'f32[1,1]{1,0:T(1,128)S(1)}', space=vmem, size = 0x200, scoped, tag = 'scoped memory for tpu_custom_call.1']
  %s0 = inlined_call_operand.hbm [shape: f32[16,64], index: 0, kind: input, shape index: {}]
  %s1 = inlined_call_operand.hbm [shape: bf16[64,256], index: 1, kind: input, shape index: {}]
  %s2 = inlined_call_operand.vmem [shape: bf16[1,256], index: 2, kind: input, shape index: {}]
  %s3 = inlined_call_operand.hbm [shape: bf16[256,128], index: 3, kind: input, shape index: {}]
  %s4 = inlined_call_operand.vmem [shape: bf16[1,128], index: 4, kind: input, shape index: {}]
  %s5 = inlined_call_operand.vmem [shape: f32[1,128], index: 5, kind: input, shape index: {}]
  %s6 = inlined_call_operand.<no memory space> [shape: f32[1,1], index: 6, kind: input, shape index: {}]
  %s7 = inlined_call_operand.vmem [shape: f32[16,1], index: 7, kind: output, shape index: {}]
  %s8 = sld [smem:[#allocation0]]
  $region50: #{tpu_custom_call.1} parent=0
    _
  %s10 = ssub.s32 1, %s8
  %s11 = scalar_select 0, %s10, %s8
  %v12 = vstv %s6
  %13 = vst [vmem:[#allocation2] sm:$0x1] %v12
  $region1: #{tpu_custom_call.1} parent=0
    #allocation3 [shape = 'u8[8192]{0}', space=vmem, size = 0x2000, scoped, tag = 'input window, operand 0, single buffered']
    #allocation4 [shape = 's32[1]{0}', space=sflag, size = 0x4, scoped, tag = 'scoped memory for tpu_custom_call.1']
    #allocation5 [shape = 'u8[32768]{0}', space=vmem, size = 0x8000, scoped, tag = 'input window, operand 1, single buffered']
    #allocation6 [shape = 's32[1]{0}', space=sflag, size = 0x4, scoped, tag = 'scoped memory for tpu_custom_call.1']
    #allocation7 [shape = 'u8[65536]{0}', space=vmem, size = 0x10000, scoped, tag = 'input window, operand 3, single buffered']
    %14 = vsyncpa [#allocation4], 0
    %15 = vsyncpa [#allocation6], 0
    // Predicated region
    $region2: #{tpu_custom_call.1} parent=1 // pred_check
      _
    $region3: #{tpu_custom_call.1} parent=1 // pred_check_branch
      %17 = sbr.rel (0) target = $region5
    $region4: #{tpu_custom_call.1} parent=1 // pred_region
      %s19 = ssub.s32 256, 256
      %20 = vsyncadd [#allocation4], %s19
      %s21 = sshll.u32 [#allocation3], 4
      %s22 = int_to_ptr.vmem [resolvable:$true] %s21
      %27 = dma.hbm_to_vmem [thread:$0]  %s0, 256, %s22, [#allocation4], 128, 128, 8
    $region5: #{tpu_custom_call.1} parent=1 // pred_fallthru
      _
    // Predicated region
    $region6: #{tpu_custom_call.1} parent=1 // pred_check
      _
    $region7: #{tpu_custom_call.1} parent=1 // pred_check_branch
      %29 = sbr.rel (0) target = $region9
    $region8: #{tpu_custom_call.1} parent=1 // pred_region
      %s31 = ssub.s32 1024, 1024
      %32 = vsyncadd [#allocation6], %s31
      %s33 = sshll.u32 [#allocation5], 4
      %s34 = int_to_ptr.vmem [resolvable:$true] %s33
      %39 = dma.hbm_to_vmem [thread:$0]  %s1, 1024, %s34, [#allocation6], 128, 128, 8
    $region9: #{tpu_custom_call.1} parent=1 // pred_fallthru
      _
    // Predicated region
    $region10: #{tpu_custom_call.1} parent=1 // pred_check
      _
    $region11: #{tpu_custom_call.1} parent=1 // pred_check_branch
      %41 = sbr.rel (0) target = $region13
    $region12: #{tpu_custom_call.1} parent=1 // pred_region
      _
    $region13: #{tpu_custom_call.1} parent=1 // pred_fallthru
      _
    // Predicated region
    $region14: #{tpu_custom_call.1} parent=1 // pred_check
      _
    $region15: #{tpu_custom_call.1} parent=1 // pred_check_branch
      %43 = sbr.rel (0) target = $region17
    $region16: #{tpu_custom_call.1} parent=1 // pred_region
      %s45 = ssub.s32 2048, 2048
      %46 = vsyncadd [#allocation6], %s45
      %s47 = sshll.u32 [#allocation7], 4
      %s48 = int_to_ptr.vmem [resolvable:$true] %s47
      %53 = dma.hbm_to_vmem [thread:$0]  %s3, 2048, %s48, [#allocation6], 64, 64, 4
    $region17: #{tpu_custom_call.1} parent=1 // pred_fallthru
      _
    // Predicated region
    $region18: #{tpu_custom_call.1} parent=1 // pred_check
      _
    $region19: #{tpu_custom_call.1} parent=1 // pred_check_branch
      %55 = sbr.rel (0) target = $region21
    $region20: #{tpu_custom_call.1} parent=1 // pred_region
      _
    $region21: #{tpu_custom_call.1} parent=1 // pred_fallthru
      _
    // Predicated region
    $region22: #{tpu_custom_call.1} parent=1 // pred_check
      _
    $region23: #{tpu_custom_call.1} parent=1 // pred_check_branch
      %57 = sbr.rel (0) target = $region25
    $region24: #{tpu_custom_call.1} parent=1 // pred_region
      _
    $region25: #{tpu_custom_call.1} parent=1 // pred_fallthru
      _
    // Predicated region
    $region26: #{tpu_custom_call.1} parent=1 // pred_check
      _
    $region27: #{tpu_custom_call.1} parent=1 // pred_check_branch
      %59 = sbr.rel (0) target = $region29
    $region28: #{tpu_custom_call.1} parent=1 // pred_region
      _
    $region29: #{tpu_custom_call.1} parent=1 // pred_fallthru
      _
    // Predicated region
    $region30: #{tpu_custom_call.1} parent=1 // pred_check
      _
    $region31: #{tpu_custom_call.1} parent=1 // pred_check_branch
      %61 = sbr.rel (0) target = $region33
    $region32: #{tpu_custom_call.1} parent=1 // pred_region
      %62 = dma.done [#allocation4], 256
    $region33: #{tpu_custom_call.1} parent=1 // pred_fallthru
      _
    // Predicated region
    $region34: #{tpu_custom_call.1} parent=1 // pred_check
      _
    $region35: #{tpu_custom_call.1} parent=1 // pred_check_branch
      %64 = sbr.rel (0) target = $region37
    $region36: #{tpu_custom_call.1} parent=1 // pred_region
      %65 = dma.done [#allocation6], 1024
    $region37: #{tpu_custom_call.1} parent=1 // pred_fallthru
      _
    // Predicated region
    $region38: #{tpu_custom_call.1} parent=1 // pred_check
      _
    $region39: #{tpu_custom_call.1} parent=1 // pred_check_branch
      %67 = sbr.rel (0) target = $region41
    $region40: #{tpu_custom_call.1} parent=1 // pred_region
      %68 = dma.done [#allocation6], 2048
    $region41: #{tpu_custom_call.1} parent=1 // pred_fallthru
      _
    %v71 = vld [vmem:[#allocation3] sm:$0xff]
    %v72 = vld [vmem:[#allocation3 + $0x8] sm:$0xff]
    %v73 = vpack.c.bf16 %v72, %v71
    %v74 = vld [vmem:[#allocation5] sm:$0xff]
    %v75 = vld [vmem:[#allocation5 + $0x8] sm:$0xff]
    %v76 = vld [vmem:[#allocation5 + $0x10] sm:$0xff]
    %v77 = vld [vmem:[#allocation5 + $0x18] sm:$0xff]
    %v78 = vld [vmem:[#allocation5 + $0x20] sm:$0xff]
    %v79 = vld [vmem:[#allocation5 + $0x28] sm:$0xff]
    %v80 = vld [vmem:[#allocation5 + $0x30] sm:$0xff]
    %v81 = vld [vmem:[#allocation5 + $0x38] sm:$0xff]
    %v90 = vunpack.c.l.b16 %v74
    %v91 = vunpack.c.h.b16 %v74
    %v92 = vunpack.c.l.b16 %v75
    %v93 = vunpack.c.h.b16 %v75
    %v94 = vunpack.c.l.b16 %v76
    %v95 = vunpack.c.h.b16 %v76
    %v96 = vunpack.c.l.b16 %v77
    %v97 = vunpack.c.h.b16 %v77
    %v98 = vunpack.c.l.b16 %v78
    %v99 = vunpack.c.h.b16 %v78
    %v100 = vunpack.c.l.b16 %v79
    %v101 = vunpack.c.h.b16 %v79
    %v102 = vunpack.c.l.b16 %v80
    %v103 = vunpack.c.h.b16 %v80
    %v104 = vunpack.c.l.b16 %v81
    %v105 = vunpack.c.h.b16 %v81
    %v106 = vpack.c.b16 %v92, %v90
    %v107 = vpack.c.b16 %v93, %v91
    %v108 = vpack.c.b16 %v96, %v94
    %v109 = vpack.c.b16 %v97, %v95
    %v110 = vpack.c.b16 %v100, %v98
    %v111 = vpack.c.b16 %v101, %v99
    %v112 = vpack.c.b16 %v104, %v102
    %v113 = vpack.c.b16 %v105, %v103
    %vm122 = vcmask 523264
    %v124 = vsel %vm122, %v73, 0
    %126 = vmatprep.subr.bf16.mxu0 0
    %127 = vmatpush1.bf16.msra.mxu0 0
    %128 = vmatprep.subr.bf16.mxu0 0
    %129 = vmatpush1.bf16.msra.mxu0 0
    %130 = vmatprep.subr.bf16.mxu0 0
    %131 = vmatpush1.bf16.msra.mxu0 0
    %132 = vmatprep.subr.bf16.mxu0 0
    %133 = vmatpush1.bf16.msra.mxu0 0
    %134 = vmatprep.subr.bf16.mxu0 %v113
    %135 = vmatpush1.bf16.msra.mxu0 %v112
    %136 = vmatprep.subr.bf16.mxu0 %v111
    %137 = vmatpush1.bf16.msra.mxu0 %v110
    %138 = vmatprep.subr.bf16.mxu0 %v109
    %139 = vmatpush1.bf16.msra.mxu0 %v108
    %140 = vmatprep.subr.bf16.mxu0 %v107
    %141 = vmatpush1.bf16.msra.mxu0 %v106
    %142 = vmatprep.subr.bf16.mxu0 0
    %143 = vmatpush2.bf16.msra.mxu0 0
    %144 = vmatprep.subr.bf16.mxu0 0
    %145 = vmatpush2.bf16.msra.mxu0 0
    %146 = vmatprep.subr.bf16.mxu0 0
    %147 = vmatpush2.bf16.msra.mxu0 0
    %148 = vmatprep.subr.bf16.mxu0 0
    %149 = vmatpush2.bf16.msra.mxu0 0
    %150 = vmatprep.subr.bf16.mxu0 0
    %151 = vmatpush2.bf16.msra.mxu0 0
    %152 = vmatprep.subr.bf16.mxu0 0
    %153 = vmatpush2.bf16.msra.mxu0 0
    %154 = vmatprep.subr.bf16.mxu0 0
    %155 = vmatpush2.bf16.msra.mxu0 0
    %156 = vmatprep.subr.bf16.mxu0 0
    %157 = vmatpush2.bf16.msra.mxu0 0
    %158 = vmatprep.mubr.bf16.mxu0 0
    %159 = vmatmul.mubr.bf16.gmra.mxu0 %v124
    %v160 = vpop.f32.mrf.mxu0
    %v161 = vadd.f32 0.0, %v160
    %v162 = vpop.f32.mrf.mxu0
    %v163 = vadd.f32 0.0, %v162
    %v164 = vpop.f32.mrf.mxu0
    %v165 = vadd.f32 0.0, %v164
    %v166 = vpop.f32.mrf.mxu0
    %v167 = vadd.f32 0.0, %v166
    %168 = vdwg.mxu0
    %v169 = vpack.c.bf16 %v165, %v161
    %v170 = vpack.c.bf16 %v167, %v163
    %v171 = vld [vmem:[%s2] sm:$0x3]
    %v174 = vunpack.c.l.s4 1966171168
    %v175 = vunpack.c.0.s8 %v174
    %v176 = vlaneseq
    %v177 = vshrl.u32 %v176, 7
    %v178 = vsub.s32 %v175, %v177
    %v179 = vrot.slane %v171, %v178
    %v180 = vcombine.high %v179, %v179
    %v182 = vunpack.c.l.s4 1966171168
    %v183 = vunpack.c.0.s8 %v182
    %v184 = vlaneseq
    %v185 = vshrl.u32 %v184, 7
    %v186 = vsub.s32 %v183, %v185
    %v187 = vrot.slane %v179, %v186
    %v189 = vunpack.c.l.s4 1966171168
    %v190 = vunpack.c.0.s8 %v189
    %v191 = vlaneseq
    %v192 = vshrl.u32 %v191, 7
    %v193 = vsub.s32 %v190, %v192
    %v194 = vrot.slane %v180, %v193
    %v196 = vpack.i.b16 %v187, %v187
    %v198 = vlaneseq
    %v199 = vshrl.u32 %v198, 7
    %v200 = vsub.s32 0, %v199
    %v201 = vrot.slane %v196, %v200
    %v203 = vpack.i.b16 %v194, %v194
    %v205 = vlaneseq
    %v206 = vshrl.u32 %v205, 7
    %v207 = vsub.s32 0, %v206
    %v208 = vrot.slane %v203, %v207
    %v209 = vadd.bf16 %v169, %v201
    %v210 = vadd.bf16 %v170, %v208
    %v211 = vmul.bf16 %v209, 1045249613
    %v212 = vmul.bf16 %v210, 1045249613
    %v213 = vmax.bf16 %v209, %v211
    %v214 = vmax.bf16 %v210, %v212
    %v215 = vld [vmem:[#allocation7] sm:$0xf]
    %v216 = vld [vmem:[#allocation7 + $0x4] sm:$0xf]
    %v217 = vld [vmem:[#allocation7 + $0x8] sm:$0xf]
    %v218 = vld [vmem:[#allocation7 + $0xc] sm:$0xf]
    %v219 = vld [vmem:[#allocation7 + $0x10] sm:$0xf]
    %v220 = vld [vmem:[#allocation7 + $0x14] sm:$0xf]
    %v221 = vld [vmem:[#allocation7 + $0x18] sm:$0xf]
    %v222 = vld [vmem:[#allocation7 + $0x1c] sm:$0xf]
    %v223 = vld [vmem:[#allocation7 + $0x20] sm:$0xf]
    %v224 = vld [vmem:[#allocation7 + $0x24] sm:$0xf]
    %v225 = vld [vmem:[#allocation7 + $0x28] sm:$0xf]
    %v226 = vld [vmem:[#allocation7 + $0x2c] sm:$0xf]
    %v227 = vld [vmem:[#allocation7 + $0x30] sm:$0xf]
    %v228 = vld [vmem:[#allocation7 + $0x34] sm:$0xf]
    %v229 = vld [vmem:[#allocation7 + $0x38] sm:$0xf]
    %v230 = vld [vmem:[#allocation7 + $0x3c] sm:$0xf]
    %v231 = vld [vmem:[#allocation7 + $0x40] sm:$0xf]
    %v232 = vld [vmem:[#allocation7 + $0x44] sm:$0xf]
    %v233 = vld [vmem:[#allocation7 + $0x48] sm:$0xf]
    %v234 = vld [vmem:[#allocation7 + $0x4c] sm:$0xf]
    %v235 = vld [vmem:[#allocation7 + $0x50] sm:$0xf]
    %v236 = vld [vmem:[#allocation7 + $0x54] sm:$0xf]
    %v237 = vld [vmem:[#allocation7 + $0x58] sm:$0xf]
    %v238 = vld [vmem:[#allocation7 + $0x5c] sm:$0xf]
    %v239 = vld [vmem:[#allocation7 + $0x60] sm:$0xf]
    %v240 = vld [vmem:[#allocation7 + $0x64] sm:$0xf]
    %v241 = vld [vmem:[#allocation7 + $0x68] sm:$0xf]
    %v242 = vld [vmem:[#allocation7 + $0x6c] sm:$0xf]
    %v243 = vld [vmem:[#allocation7 + $0x70] sm:$0xf]
    %v244 = vld [vmem:[#allocation7 + $0x74] sm:$0xf]
    %v245 = vld [vmem:[#allocation7 + $0x78] sm:$0xf]
    %v246 = vld [vmem:[#allocation7 + $0x7c] sm:$0xf]
    %v279 = vunpack.c.l.b16 %v215
    %v280 = vunpack.c.l.b16 %v216
    %v281 = vunpack.c.l.b16 %v217
    %v282 = vunpack.c.l.b16 %v218
    %v283 = vunpack.c.l.b16 %v219
    %v284 = vunpack.c.l.b16 %v220
    %v285 = vunpack.c.l.b16 %v221
    %v286 = vunpack.c.l.b16 %v222
    %v287 = vunpack.c.l.b16 %v223
    %v288 = vunpack.c.l.b16 %v224
    %v289 = vunpack.c.l.b16 %v225
    %v290 = vunpack.c.l.b16 %v226
    %v291 = vunpack.c.l.b16 %v227
    %v292 = vunpack.c.l.b16 %v228
    %v293 = vunpack.c.l.b16 %v229
    %v294 = vunpack.c.l.b16 %v230
    %v295 = vunpack.c.l.b16 %v231
    %v296 = vunpack.c.l.b16 %v232
    %v297 = vunpack.c.l.b16 %v233
    %v298 = vunpack.c.l.b16 %v234
    %v299 = vunpack.c.l.b16 %v235
    %v300 = vunpack.c.l.b16 %v236
    %v301 = vunpack.c.l.b16 %v237
    %v302 = vunpack.c.l.b16 %v238
    %v303 = vunpack.c.l.b16 %v239
    %v304 = vunpack.c.l.b16 %v240
    %v305 = vunpack.c.l.b16 %v241
    %v306 = vunpack.c.l.b16 %v242
    %v307 = vunpack.c.l.b16 %v243
    %v308 = vunpack.c.l.b16 %v244
    %v309 = vunpack.c.l.b16 %v245
    %v310 = vunpack.c.l.b16 %v246
    %v311 = vpack.c.b16 %v280, %v279
    %v312 = vpack.c.b16 %v282, %v281
    %v313 = vpack.c.b16 %v284, %v283
    %v314 = vpack.c.b16 %v286, %v285
    %v315 = vpack.c.b16 %v288, %v287
    %v316 = vpack.c.b16 %v290, %v289
    %v317 = vpack.c.b16 %v292, %v291
    %v318 = vpack.c.b16 %v294, %v293
    %v319 = vpack.c.b16 %v296, %v295
    %v320 = vpack.c.b16 %v298, %v297
    %v321 = vpack.c.b16 %v300, %v299
    %v322 = vpack.c.b16 %v302, %v301
    %v323 = vpack.c.b16 %v304, %v303
    %v324 = vpack.c.b16 %v306, %v305
    %v325 = vpack.c.b16 %v308, %v307
    %v326 = vpack.c.b16 %v310, %v309
    %343 = vmatprep.subr.bf16.mxu0 0
    %344 = vmatpush1.bf16.msra.mxu0 %v318
    %345 = vmatprep.subr.bf16.mxu0 0
    %346 = vmatpush1.bf16.msra.mxu0 %v317
    %347 = vmatprep.subr.bf16.mxu0 0
    %348 = vmatpush1.bf16.msra.mxu0 %v316
    %349 = vmatprep.subr.bf16.mxu0 0
    %350 = vmatpush1.bf16.msra.mxu0 %v315
    %351 = vmatprep.subr.bf16.mxu0 0
    %352 = vmatpush1.bf16.msra.mxu0 %v314
    %353 = vmatprep.subr.bf16.mxu0 0
    %354 = vmatpush1.bf16.msra.mxu0 %v313
    %355 = vmatprep.subr.bf16.mxu0 0
    %356 = vmatpush1.bf16.msra.mxu0 %v312
    %357 = vmatprep.subr.bf16.mxu0 0
    %358 = vmatpush1.bf16.msra.mxu0 %v311
    %359 = vmatprep.subr.bf16.mxu0 0
    %360 = vmatpush2.bf16.msra.mxu0 %v326
    %361 = vmatprep.subr.bf16.mxu0 0
    %362 = vmatpush2.bf16.msra.mxu0 %v325
    %363 = vmatprep.subr.bf16.mxu0 0
    %364 = vmatpush2.bf16.msra.mxu0 %v324
    %365 = vmatprep.subr.bf16.mxu0 0
    %366 = vmatpush2.bf16.msra.mxu0 %v323
    %367 = vmatprep.subr.bf16.mxu0 0
    %368 = vmatpush2.bf16.msra.mxu0 %v322
    %369 = vmatprep.subr.bf16.mxu0 0
    %370 = vmatpush2.bf16.msra.mxu0 %v321
    %371 = vmatprep.subr.bf16.mxu0 0
    %372 = vmatpush2.bf16.msra.mxu0 %v320
    %373 = vmatprep.subr.bf16.mxu0 0
    %374 = vmatpush2.bf16.msra.mxu0 %v319
    %375 = vmatprep.mubr.bf16.mxu0 %v214
    %376 = vmatmul.mubr.bf16.gmra.mxu0 %v213
    %v377 = vpop.f32.mrf.mxu0
    %v378 = vadd.f32 0.0, %v377
    %v379 = vpop.f32.mrf.mxu0
    %v380 = vpop.f32.mrf.mxu0
    %v381 = vadd.f32 0.0, %v380
    %v382 = vpop.f32.mrf.mxu0
    %383 = vdwg.mxu0
    %v384 = vpack.c.bf16 %v381, %v378
    %v385 = vld [vmem:[%s4] sm:$0x1]
    %v387 = vpack.i.b16 %v385, %v385
    %v389 = vlaneseq
    %v390 = vshrl.u32 %v389, 7
    %v391 = vsub.s32 0, %v390
    %v392 = vrot.slane %v387, %v391
    %v393 = vadd.bf16 %v384, %v392
    %v394 = vmul.bf16 %v393, 1045249613
    %v395 = vmax.bf16 %v393, %v394
    %v396 = vunpack.c.l.bf16 %v395
    %v397 = vunpack.c.h.bf16 %v395
    %v398 = vld [vmem:[%s5] sm:$0x1]
    %v400 = vlaneseq
    %v401 = vshrl.u32 %v400, 7
    %v402 = vsub.s32 0, %v401
    %v403 = vrot.slane %v398, %v402
    %v405 = vmul.f32 %v396, %v403
    %v406 = vmul.f32 %v397, %v403
    %407 = vadd.xlane.f32.xlu0 %v405
    %v408 = vpop.xlane.xlu0 %407
    %409 = vadd.xlane.f32.xlu0 %v406
    %v410 = vpop.xlane.xlu0 %409
    %v411 = vld [vmem:[#allocation2] sm:$0x1]
    %v413 = vlaneseq
    %v414 = vshrl.u32 %v413, 7
    %v415 = vsub.s32 0, %v414
    %v416 = vrot.slane %v411, %v415
    %v418 = vadd.f32 %v408, %v416
    %v419 = vadd.f32 %v410, %v416
    %v420 = vxor.u32 %v418, 2147483648
    %v421 = vxor.u32 %v419, 2147483648
    %v422 = vmul.f32 %v420, 1.442695
    %v423 = vpow.pop %v422
    %v424 = vmul.f32 %v421, 1.442695
    %v425 = vpow.pop %v424
    %v426 = vadd.f32 %v423, 1.0
    %v427 = vadd.f32 %v425, 1.0
    %v428 = vrcp.pop %v426
    %v429 = vmul.f32 1.0, %v428
    %v430 = vrcp.pop %v427
    %v431 = vmul.f32 1.0, %v430
    %vm432 = vcmask 7168
    %433 = vst.msk [vmem:[%s7] sm:$0xff] %vm432, %v429
    %434 = vst.msk [vmem:[%s7 + $0x8] sm:$0xff] %vm432, %v431
    // Predicated region
    $region42: #{tpu_custom_call.1} parent=1 // pred_check
      _
    $region43: #{tpu_custom_call.1} parent=1 // pred_check_branch
      %436 = sbr.rel (0) target = $region45
    $region44: #{tpu_custom_call.1} parent=1 // pred_region
      _
    $region45: #{tpu_custom_call.1} parent=1 // pred_fallthru
      _
    // Predicated region
    $region46: #{tpu_custom_call.1} parent=1 // pred_check
      _
    $region47: #{tpu_custom_call.1} parent=1 // pred_check_branch
      %438 = sbr.rel (0) target = $region49
    $region48: #{tpu_custom_call.1} parent=1 // pred_region
      _
    $region49: #{tpu_custom_call.1} parent=1 // pred_fallthru
      _
    %439 = vsyncpa [#allocation4], 1
    %440 = vsyncpa [#allocation6], 1

</llo_original>
